<compile_context>
chip_gen: v7x
topology: tpu7x:2x2x1
jax: 0.10.0
libtpu: 0.0.40
codegen_flags: <defaults>
</compile_context>

<pallas_src>
import functools

import jax
import jax.numpy as jnp
from jax.experimental import pallas as pl
from jax.experimental.pallas import tpu as pltpu


def _round_up(x, m):
    return (x + m - 1) // m * m


def _param_layout(state_size, h1, h2):
    """Sublane row offsets of each tensor inside the packed (rows, 128) slab."""
    r_w1 = 0
    r_b1 = _round_up(state_size, 8)
    r_w2 = r_b1 + 8
    r_b2 = r_w2 + _round_up(h1, 8)
    r_w3 = r_b2 + 8
    r_b3 = r_w3 + 8
    rows = _round_up(r_b3 + 8, 8)
    return (r_w1, r_b1, r_w2, r_b2, r_w3, r_b3), rows


def pack_critic_params(params, state_size=5, h1=20, h2=20):
    """Pack all weights/biases into a single lane-padded f32 slab (rows, 128)."""
    w1, b1, w2, b2, w3, b3 = params
    (r_w1, r_b1, r_w2, r_b2, r_w3, r_b3), rows = _param_layout(state_size, h1, h2)
    blob = jnp.zeros((rows, 128), jnp.float32)
    blob = blob.at[r_w1:r_w1 + state_size, 0:h1].set(w1)
    blob = blob.at[r_b1, 0:h1].set(b1)
    blob = blob.at[r_w2:r_w2 + h1, 0:h2].set(w2)
    blob = blob.at[r_b2, 0:h2].set(b2)
    blob = blob.at[r_w3, 0:h2].set(w3[:, 0])   # fc3 weight stored as a row
    blob = blob.at[r_b3, 0].set(b3[0])
    return blob


def _critic_kernel(x_ref, p_ref, o_ref, *, state_size, h1, h2, rows_layout):
    r_w1, r_b1, r_w2, r_b2, r_w3, r_b3 = rows_layout

    x = x_ref[...]                                   # (TILE_B, state_size) f32
    w1 = p_ref[r_w1:r_w1 + state_size, 0:h1]         # (state_size, h1)
    b1 = p_ref[r_b1:r_b1 + 1, 0:h1]                  # (1, h1)
    w2 = p_ref[r_w2:r_w2 + h1, 0:h2]                 # (h1, h2)
    b2 = p_ref[r_b2:r_b2 + 1, 0:h2]                  # (1, h2)
    w3 = p_ref[r_w3:r_w3 + 1, 0:h2]                  # (1, h2)  fc3 weight row
    b3 = p_ref[r_b3:r_b3 + 1, 0:1]                   # (1, 1)

    # fc1 + ReLU
    h = jnp.dot(x, w1, preferred_element_type=jnp.float32) + b1
    h = jnp.maximum(h, 0.0)

    # fc2 + ReLU
    h = jnp.dot(h, w2, preferred_element_type=jnp.float32) + b2
    h = jnp.maximum(h, 0.0)

    # fc3 (out_features = 1): VPU multiply + cross-lane (XLU) reduce instead of
    # a nearly-empty MXU matmul.
    out = jnp.sum(h * w3, axis=-1, keepdims=True) + b3
    o_ref[...] = out.astype(o_ref.dtype)


def critic_forward(state, packed_params, *, state_size=5, h1=20, h2=20):
    """state: (B, state_size) f32, packed_params: (rows, 128) f32 -> (B, 1) f32."""
    B, S = state.shape
    assert S == state_size
    rows_layout, rows = _param_layout(state_size, h1, h2)
    assert packed_params.shape == (rows, 128)

    # Batch tiling: single block for small B, 128-row tiles (parallel grid) for
    # large B so work can shard across TensorCores (v7x megacore).
    tile_b = min(128, _round_up(B, 8))
    b_pad = _round_up(B, tile_b)
    x = state if b_pad == B else jnp.pad(state, ((0, b_pad - B), (0, 0)))

    kernel = functools.partial(
        _critic_kernel,
        state_size=state_size, h1=h1, h2=h2, rows_layout=rows_layout)

    flops = 2 * b_pad * (state_size * h1 + h1 * h2 + h2)
    bytes_accessed = int(x.size * 4 + packed_params.size * 4 + b_pad * 4)

    out = pl.pallas_call(
        kernel,
        out_shape=jax.ShapeDtypeStruct((b_pad, 1), jnp.float32),
        grid=(b_pad // tile_b,),
        in_specs=[
            pl.BlockSpec((tile_b, state_size), lambda i: (i, 0)),
            pl.BlockSpec((rows, 128), lambda i: (0, 0)),
        ],
        out_specs=pl.BlockSpec((tile_b, 1), lambda i: (i, 0)),
        compiler_params=pltpu.CompilerParams(
            dimension_semantics=("parallel",)),
        cost_estimate=pl.CostEstimate(
            flops=flops, transcendentals=0, bytes_accessed=bytes_accessed),
    )(x, packed_params)
    return out[:B]


def init_critic_params(key, state_size=5, h1=20, h2=20):
    """Deterministic init mimicking PyTorch nn.Linear (uniform +/- 1/sqrt(fan_in)).
    Weights are stored as (in_features, out_features), biases as (out_features,)."""
    def linear(k, fan_in, fan_out):
        kw, kb = jax.random.split(k)
        bound = 1.0 / jnp.sqrt(fan_in)
        w = jax.random.uniform(kw, (fan_in, fan_out), jnp.float32, -bound, bound)
        b = jax.random.uniform(kb, (fan_out,), jnp.float32, -bound, bound)
        return w, b

    k1, k2, k3 = jax.random.split(key, 3)
    w1, b1 = linear(k1, state_size, h1)
    w2, b2 = linear(k2, h1, h2)
    w3, b3 = linear(k3, h2, 1)
    return (w1, b1, w2, b2, w3, b3)


def critic_reference(state, params):
    """Pure-JAX reference (matches PyTorch forward semantics)."""
    w1, b1, w2, b2, w3, b3 = params
    h = jax.nn.relu(state @ w1 + b1)
    h = jax.nn.relu(h @ w2 + b2)
    return h @ w3 + b3


if __name__ == "__main__":
    key = jax.random.PRNGKey(0)
    k_params, k_state = jax.random.split(key)

    state_size, h1, h2, batch = 5, 20, 20, 8
    params = init_critic_params(k_params, state_size=state_size, h1=h1, h2=h2)
    packed = pack_critic_params(params, state_size=state_size, h1=h1, h2=h2)
    state = jax.random.normal(k_state, (batch, state_size), dtype=jnp.float32)

    out = critic_forward(state, packed, state_size=state_size, h1=h1, h2=h2)
    out = jax.block_until_ready(out)

    ref = critic_reference(state, params)
    assert out.shape == (batch, 1), out.shape
    assert jnp.allclose(out, ref, atol=1e-5, rtol=1e-5), "mismatch vs reference"

    print("KERNEL_OK")
</pallas_src>

<mosaic_0001>
module attributes {stable_mosaic.version = 11 : i64} {
  func.func @_critic_kernel(%arg0: i32, %arg1: memref<8x5xf32, #tpu.memory_space<vmem>>, %arg2: memref<64x128xf32, #tpu.memory_space<vmem>>, %arg3: memref<8x1xf32, #tpu.memory_space<vmem>>) attributes {dimension_semantics = [#tpu.dimension_semantics<parallel>], iteration_bounds = array<i64: 1>, scalar_prefetch = 0 : i64, scratch_operands = 0 : i64, tpu.core_type = #tpu.core_type<tc>, window_params = [{transform_indices = @transform_0, window_bounds = array<i64: 8, 5>}, {pipeline_mode = #tpu.pipeline_mode<synchronous>, transform_indices = @transform_1, window_bounds = array<i64: 64, 128>}, {transform_indices = @transform_2, window_bounds = array<i64: 8, 1>}]} {
    %c0 = arith.constant 0 : index
    %c0_0 = arith.constant 0 : index
    %0 = vector.load %arg1[%c0, %c0_0] : memref<8x5xf32, #tpu.memory_space<vmem>>, vector<8x5xf32>
    %c0_1 = arith.constant 0 : index
    %c0_2 = arith.constant 0 : index
    %1 = vector.load %arg2[%c0_1, %c0_2] : memref<64x128xf32, #tpu.memory_space<vmem>>, vector<5x20xf32>
    %c8 = arith.constant 8 : index
    %c0_3 = arith.constant 0 : index
    %2 = vector.load %arg2[%c8, %c0_3] : memref<64x128xf32, #tpu.memory_space<vmem>>, vector<1x20xf32>
    %c16 = arith.constant 16 : index
    %c0_4 = arith.constant 0 : index
    %3 = vector.load %arg2[%c16, %c0_4] : memref<64x128xf32, #tpu.memory_space<vmem>>, vector<20x20xf32>
    %c40 = arith.constant 40 : index
    %c0_5 = arith.constant 0 : index
    %4 = vector.load %arg2[%c40, %c0_5] : memref<64x128xf32, #tpu.memory_space<vmem>>, vector<1x20xf32>
    %c48 = arith.constant 48 : index
    %c0_6 = arith.constant 0 : index
    %5 = vector.load %arg2[%c48, %c0_6] : memref<64x128xf32, #tpu.memory_space<vmem>>, vector<1x20xf32>
    %c56 = arith.constant 56 : index
    %c0_7 = arith.constant 0 : index
    %6 = vector.load %arg2[%c56, %c0_7] : memref<64x128xf32, #tpu.memory_space<vmem>>, vector<1x1xf32>
    %cst = arith.constant dense<0.000000e+00> : vector<8x20xf32>
    %7 = tpu.matmul %0, %1, %cst {dimension_numbers = #tpu.dot_dimension_numbers<[1], [0], [0], [1], [0, 0, 1, 1], [], []>} : vector<8x5xf32>, vector<5x20xf32>, vector<8x20xf32> -> vector<8x20xf32>
    %8 = vector.broadcast %2 : vector<1x20xf32> to vector<8x20xf32>
    %9 = arith.addf %7, %8 : vector<8x20xf32>
    %cst_8 = arith.constant 0.000000e+00 : f32
    %10 = vector.broadcast %cst_8 : f32 to vector<8x20xf32>
    %11 = arith.maximumf %9, %10 : vector<8x20xf32>
    %cst_9 = arith.constant dense<0.000000e+00> : vector<8x20xf32>
    %12 = tpu.matmul %11, %3, %cst_9 {dimension_numbers = #tpu.dot_dimension_numbers<[1], [0], [0], [1], [0, 0, 1, 1], [], []>} : vector<8x20xf32>, vector<20x20xf32>, vector<8x20xf32> -> vector<8x20xf32>
    %13 = vector.broadcast %4 : vector<1x20xf32> to vector<8x20xf32>
    %14 = arith.addf %12, %13 : vector<8x20xf32>
    %cst_10 = arith.constant 0.000000e+00 : f32
    %15 = vector.broadcast %cst_10 : f32 to vector<8x20xf32>
    %16 = arith.maximumf %14, %15 : vector<8x20xf32>
    %17 = vector.broadcast %5 : vector<1x20xf32> to vector<8x20xf32>
    %18 = arith.mulf %16, %17 : vector<8x20xf32>
    %cst_11 = arith.constant dense<0.000000e+00> : vector<8xf32>
    %19 = vector.multi_reduction <add>, %18, %cst_11 [1] : vector<8x20xf32> to vector<8xf32>
    %20 = vector.shape_cast %19 : vector<8xf32> to vector<8x1xf32>
    %21 = vector.broadcast %6 : vector<1x1xf32> to vector<8x1xf32>
    %22 = arith.addf %20, %21 : vector<8x1xf32>
    %c0_12 = arith.constant 0 : index
    %c0_13 = arith.constant 0 : index
    %23 = vector.load %arg3[%c0_12, %c0_13] : memref<8x1xf32, #tpu.memory_space<vmem>>, vector<8x1xf32>
    tpu.vector_store %arg3[%c0_12, %c0_13], %22 {strides = array<i32>} : memref<8x1xf32, #tpu.memory_space<vmem>>, vector<8x1xf32>,
    return
  }
  func.func @transform_0(%arg0: i32) -> (i32, i32) {
    %c0_i32 = arith.constant 0 : i32
    %c0_i32_0 = arith.constant 0 : i32
    return %arg0, %c0_i32 : i32, i32
  }
  func.func @transform_1(%arg0: i32) -> (i32, i32) {
    %c0_i32 = arith.constant 0 : i32
    %c0_i32_0 = arith.constant 0 : i32
    %c0_i32_1 = arith.constant 0 : i32
    return %c0_i32, %c0_i32_0 : i32, i32
  }
  func.func @transform_2(%arg0: i32) -> (i32, i32) {
    %c0_i32 = arith.constant 0 : i32
    %c0_i32_0 = arith.constant 0 : i32
    return %arg0, %c0_i32 : i32, i32
  }
}

</mosaic_0001>

<llo_original>
// kernel: tpu_custom_call.1
$region0: #{tpu_custom_call.1}
  #allocation0 [shape = 'u32[]', space=smem, size = 0x4, offset = 0x4, fixed_abs, tag = 'smem constant byte address 0x4 - core index']
  #allocation1 [shape = 'u32[144,128]{1,0:T(1,128)}', space=vmem, size = 0x12000, scoped, tag = 'internal scratch']
  %s0 = inlined_call_operand.hbm [shape: f32[8,5], index: 0, kind: input, shape index: {}]
  %s1 = inlined_call_operand.hbm [shape: f32[64,128], index: 1, kind: input, shape index: {}]
  %s2 = inlined_call_operand.vmem [shape: f32[8,1], index: 2, kind: output, shape index: {}]
  %s3 = sld [smem:[#allocation0]]
  $region26: #{tpu_custom_call.1} parent=0
    _
  %s5 = ssub.s32 1, %s3
  %s6 = scalar_select 0, %s5, %s3
  $region1: #{tpu_custom_call.1} parent=0
    #allocation2 [shape = 'u8[4096]{0}', space=vmem, size = 0x1000, scoped, tag = 'input window, operand 0, single buffered']
    #allocation3 [shape = 's32[1]{0}', space=sflag, size = 0x4, scoped, tag = 'scoped memory for tpu_custom_call.1']
    #allocation4 [shape = 'u8[32768]{0}', space=vmem, size = 0x8000, scoped, tag = 'input window, operand 1, single buffered']
    #allocation5 [shape = 's32[1]{0}', space=sflag, size = 0x4, scoped, tag = 'scoped memory for tpu_custom_call.1']
    %7 = vsyncpa [#allocation3], 0
    %8 = vsyncpa [#allocation5], 0
    // Predicated region
    $region2: #{tpu_custom_call.1} parent=1 // pred_check
      _
    $region3: #{tpu_custom_call.1} parent=1 // pred_check_branch
      %10 = sbr.rel (0) target = $region5
    $region4: #{tpu_custom_call.1} parent=1 // pred_region
      %s12 = ssub.s32 128, 128
      %13 = vsyncadd [#allocation3], %s12
      %s15 = sshll.u32 [#allocation2], 4
      %s16 = int_to_ptr.vmem [resolvable:$true] %s15
      %18 = dma.hbm_to_vmem [thread:$0]  %s0, 128, %s16, [#allocation3]
    $region5: #{tpu_custom_call.1} parent=1 // pred_fallthru
      _
    // Predicated region
    $region6: #{tpu_custom_call.1} parent=1 // pred_check
      _
    $region7: #{tpu_custom_call.1} parent=1 // pred_check_branch
      %20 = sbr.rel (0) target = $region9
    $region8: #{tpu_custom_call.1} parent=1 // pred_region
      %s22 = ssub.s32 1024, 1024
      %23 = vsyncadd [#allocation5], %s22
      %s24 = sshll.u32 [#allocation4], 4
      %s25 = int_to_ptr.vmem [resolvable:$true] %s24
      %30 = dma.hbm_to_vmem [thread:$0]  %s1, 1024, %s25, [#allocation5], 128, 128, 8
    $region9: #{tpu_custom_call.1} parent=1 // pred_fallthru
      _
    // Predicated region
    $region10: #{tpu_custom_call.1} parent=1 // pred_check
      _
    $region11: #{tpu_custom_call.1} parent=1 // pred_check_branch
      %32 = sbr.rel (0) target = $region13
    $region12: #{tpu_custom_call.1} parent=1 // pred_region
      %33 = dma.done [#allocation3], 128
    $region13: #{tpu_custom_call.1} parent=1 // pred_fallthru
      _
    // Predicated region
    $region14: #{tpu_custom_call.1} parent=1 // pred_check
      _
    $region15: #{tpu_custom_call.1} parent=1 // pred_check_branch
      %35 = sbr.rel (0) target = $region17
    $region16: #{tpu_custom_call.1} parent=1 // pred_region
      %36 = dma.done [#allocation5], 1024
    $region17: #{tpu_custom_call.1} parent=1 // pred_fallthru
      _
    %v37 = vld [vmem:[#allocation2] sm:$0xff]
    %v38 = vld [vmem:[#allocation4] sm:$0x1f]
    %v39 = vld [vmem:[#allocation4 + $0x8] sm:$0x1]
    %v40 = vld [vmem:[#allocation4 + $0x10] sm:$0xff]
    %v41 = vld [vmem:[#allocation4 + $0x18] sm:$0xff]
    %v42 = vld [vmem:[#allocation4 + $0x20] sm:$0xf]
    %v43 = vld [vmem:[#allocation4 + $0x28] sm:$0x1]
    %v44 = vld [vmem:[#allocation4 + $0x30] sm:$0x1]
    %v45 = vld [vmem:[#allocation4 + $0x38] sm:$0x1]
    %v46 = vlaneseq
    %v47 = vshrl.u32 %v46, 7
    %v48 = vsub.s32 0, %v47
    %v49 = vrot.slane %v39, %v48
    %vm50 = vcmask 39936
    %v52 = vsel %vm50, %v37, 0
    %vm54 = vcmask 1044480
    %v56 = vsel %vm54, %v38, 0
    %58 = vmatprep.subr.mxu0 0.0
    %59 = vmatpush1.msra.mxu0 %v56
    %60 = vmatprep.subr.mxu0 0.0
    %61 = vmatpush1.msra.mxu0 0.0
    %62 = vmatprep.subr.mxu0 0.0
    %63 = vmatpush1.msra.mxu0 0.0
    %64 = vmatprep.subr.mxu0 0.0
    %65 = vmatpush1.msra.mxu0 0.0
    %66 = vmatprep.subr.mxu0 0.0
    %67 = vmatpush1.msra.mxu0 0.0
    %68 = vmatprep.subr.mxu0 0.0
    %69 = vmatpush1.msra.mxu0 0.0
    %70 = vmatprep.subr.mxu0 0.0
    %71 = vmatpush1.msra.mxu0 0.0
    %72 = vmatprep.subr.mxu0 0.0
    %73 = vmatpush1.msra.mxu0 0.0
    %74 = vmatprep.subr.mxu0 0.0
    %75 = vmatpush1.msra.mxu0 0.0
    %76 = vmatprep.subr.mxu0 0.0
    %77 = vmatpush1.msra.mxu0 0.0
    %78 = vmatprep.subr.mxu0 0.0
    %79 = vmatpush1.msra.mxu0 0.0
    %80 = vmatprep.subr.mxu0 0.0
    %81 = vmatpush1.msra.mxu0 0.0
    %82 = vmatprep.subr.mxu0 0.0
    %83 = vmatpush1.msra.mxu0 0.0
    %84 = vmatprep.subr.mxu0 0.0
    %85 = vmatpush1.msra.mxu0 0.0
    %86 = vmatprep.subr.mxu0 0.0
    %87 = vmatpush1.msra.mxu0 0.0
    %88 = vmatprep.subr.mxu0 0.0
    %89 = vmatpush1.msra.mxu0 0.0
    %90 = vmatprep.subr.mxu0 0.0
    %91 = vmatpush1.msra.mxu0 0.0
    %92 = vmatprep.subr.mxu0 0.0
    %93 = vmatpush1.msra.mxu0 0.0
    %94 = vmatprep.subr.mxu0 0.0
    %95 = vmatpush1.msra.mxu0 0.0
    %96 = vmatprep.subr.mxu0 0.0
    %97 = vmatpush1.msra.mxu0 0.0
    %98 = vmatprep.subr.mxu0 0.0
    %99 = vmatpush1.msra.mxu0 0.0
    %100 = vmatprep.subr.mxu0 0.0
    %101 = vmatpush1.msra.mxu0 0.0
    %102 = vmatprep.subr.mxu0 0.0
    %103 = vmatpush1.msra.mxu0 0.0
    %104 = vmatprep.subr.mxu0 0.0
    %105 = vmatpush1.msra.mxu0 0.0
    %106 = vmatprep.subr.mxu0 0.0
    %107 = vmatpush1.msra.mxu0 0.0
    %108 = vmatprep.subr.mxu0 0.0
    %109 = vmatpush1.msra.mxu0 0.0
    %110 = vmatprep.subr.mxu0 0.0
    %111 = vmatpush1.msra.mxu0 0.0
    %112 = vmatprep.subr.mxu0 0.0
    %113 = vmatpush1.msra.mxu0 0.0
    %114 = vmatprep.subr.mxu0 0.0
    %115 = vmatpush1.msra.mxu0 0.0
    %116 = vmatprep.subr.mxu0 0.0
    %117 = vmatpush1.msra.mxu0 0.0
    %118 = vmatprep.subr.mxu0 0.0
    %119 = vmatpush1.msra.mxu0 0.0
    %120 = vmatprep.subr.mxu0 0.0
    %121 = vmatpush1.msra.mxu0 0.0
    %122 = vmatprep.mubr.f32.mxu0 0.0
    %123 = vmatmul.mubr.f32.gmra.mrb[0].mxu0 %v52
    %v124 = vpop.f32.mrb[0].mxu0
    %v125 = vadd.f32 %v49, %v124
    %v126 = vpop.f32.mrb[0].mxu0
    %127 = vdwg.mxu0
    %v128 = vmax.f32 %v125, 0.0
    %v129 = vlaneseq
    %v130 = vshrl.u32 %v129, 7
    %v131 = vsub.s32 0, %v130
    %v132 = vrot.slane %v43, %v131
    %vm133 = vcmask 162816
    %v135 = vsel %vm133, %v128, 0
    %vm137 = vcmask 1043456
    %v139 = vsel %vm137, %v42, 0
    %141 = vmatprep.subr.mxu0 0.0
    %142 = vmatpush1.msra.mxu0 %v40
    %143 = vmatprep.subr.mxu0 0.0
    %144 = vmatpush1.msra.mxu0 %v41
    %145 = vmatprep.subr.mxu0 0.0
    %146 = vmatpush1.msra.mxu0 %v139
    %147 = vmatprep.subr.mxu0 0.0
    %148 = vmatpush1.msra.mxu0 0.0
    %149 = vmatprep.subr.mxu0 0.0
    %150 = vmatpush1.msra.mxu0 0.0
    %151 = vmatprep.subr.mxu0 0.0
    %152 = vmatpush1.msra.mxu0 0.0
    %153 = vmatprep.subr.mxu0 0.0
    %154 = vmatpush1.msra.mxu0 0.0
    %155 = vmatprep.subr.mxu0 0.0
    %156 = vmatpush1.msra.mxu0 0.0
    %157 = vmatprep.subr.mxu0 0.0
    %158 = vmatpush1.msra.mxu0 0.0
    %159 = vmatprep.subr.mxu0 0.0
    %160 = vmatpush1.msra.mxu0 0.0
    %161 = vmatprep.subr.mxu0 0.0
    %162 = vmatpush1.msra.mxu0 0.0
    %163 = vmatprep.subr.mxu0 0.0
    %164 = vmatpush1.msra.mxu0 0.0
    %165 = vmatprep.subr.mxu0 0.0
    %166 = vmatpush1.msra.mxu0 0.0
    %167 = vmatprep.subr.mxu0 0.0
    %168 = vmatpush1.msra.mxu0 0.0
    %169 = vmatprep.subr.mxu0 0.0
    %170 = vmatpush1.msra.mxu0 0.0
    %171 = vmatprep.subr.mxu0 0.0
    %172 = vmatpush1.msra.mxu0 0.0
    %173 = vmatprep.subr.mxu0 0.0
    %174 = vmatpush1.msra.mxu0 0.0
    %175 = vmatprep.subr.mxu0 0.0
    %176 = vmatpush1.msra.mxu0 0.0
    %177 = vmatprep.subr.mxu0 0.0
    %178 = vmatpush1.msra.mxu0 0.0
    %179 = vmatprep.subr.mxu0 0.0
    %180 = vmatpush1.msra.mxu0 0.0
    %181 = vmatprep.subr.mxu0 0.0
    %182 = vmatpush1.msra.mxu0 0.0
    %183 = vmatprep.subr.mxu0 0.0
    %184 = vmatpush1.msra.mxu0 0.0
    %185 = vmatprep.subr.mxu0 0.0
    %186 = vmatpush1.msra.mxu0 0.0
    %187 = vmatprep.subr.mxu0 0.0
    %188 = vmatpush1.msra.mxu0 0.0
    %189 = vmatprep.subr.mxu0 0.0
    %190 = vmatpush1.msra.mxu0 0.0
    %191 = vmatprep.subr.mxu0 0.0
    %192 = vmatpush1.msra.mxu0 0.0
    %193 = vmatprep.subr.mxu0 0.0
    %194 = vmatpush1.msra.mxu0 0.0
    %195 = vmatprep.subr.mxu0 0.0
    %196 = vmatpush1.msra.mxu0 0.0
    %197 = vmatprep.subr.mxu0 0.0
    %198 = vmatpush1.msra.mxu0 0.0
    %199 = vmatprep.subr.mxu0 0.0
    %200 = vmatpush1.msra.mxu0 0.0
    %201 = vmatprep.subr.mxu0 0.0
    %202 = vmatpush1.msra.mxu0 0.0
    %203 = vmatprep.subr.mxu0 0.0
    %204 = vmatpush1.msra.mxu0 0.0
    %205 = vmatprep.mubr.f32.mxu0 0.0
    %206 = vmatmul.mubr.f32.gmra.mrb[0].mxu0 %v135
    %v207 = vpop.f32.mrb[0].mxu0
    %v208 = vadd.f32 %v132, %v207
    %v209 = vpop.f32.mrb[0].mxu0
    %210 = vdwg.mxu0
    %v211 = vmax.f32 %v208, 0.0
    %v212 = vlaneseq
    %v213 = vshrl.u32 %v212, 7
    %v214 = vsub.s32 0, %v213
    %v215 = vrot.slane %v44, %v214
    %v216 = vmul.f32 %v211, %v215
    %v217 = vsel %vm133, %v216, 0.0
    %218 = vadd.xlane.f32.xlu0 %v217
    %v219 = vpop.xlane.xlu0 %218
    %v220 = vlaneseq
    %v221 = vshrl.u32 %v220, 7
    %v222 = vsub.s32 0, %v221
    %v223 = vrot.slane %v45, %v222
    %v224 = vadd.f32 %v219, %v223
    %vm225 = vcmask 7168
    %226 = vst.msk [vmem:[%s2] sm:$0xff] %vm225, %v224
    // Predicated region
    $region18: #{tpu_custom_call.1} parent=1 // pred_check
      _
    $region19: #{tpu_custom_call.1} parent=1 // pred_check_branch
      %228 = sbr.rel (0) target = $region21
    $region20: #{tpu_custom_call.1} parent=1 // pred_region
      _
    $region21: #{tpu_custom_call.1} parent=1 // pred_fallthru
      _
    // Predicated region
    $region22: #{tpu_custom_call.1} parent=1 // pred_check
      _
    $region23: #{tpu_custom_call.1} parent=1 // pred_check_branch
      %230 = sbr.rel (0) target = $region25
    $region24: #{tpu_custom_call.1} parent=1 // pred_region
      _
    $region25: #{tpu_custom_call.1} parent=1 // pred_fallthru
      _
    %231 = vsyncpa [#allocation3], 1
    %232 = vsyncpa [#allocation5], 1

</llo_original>
